<compile_context>
chip_gen: v6e
topology: v6e:2x2x1
jax: 0.10.0
libtpu: 0.0.40
codegen_flags: <defaults>
</compile_context>

<pallas_src>
import functools

import jax
import jax.numpy as jnp
from jax.experimental import pallas as pl
from jax.experimental.pallas import tpu as pltpu

_PAIRWISE_EPS = 1e-6  # matches torch.nn.functional.pairwise_distance default


def _round_up(x, m):
    return (x + m - 1) // m * m


def _choose_block_rows(B, D, in_itemsize, budget_bytes=24 << 20, max_rows=16384):
    """Byte-driven row-tile size (multiple of 16) under a VMEM budget.

    Per-row VMEM accounting:
      * 2 input arrays x 2 pipeline buffers            -> 4 * D * in_itemsize
      * label (tb, 1) block lane-pads to 128 lanes x2  -> 2 * 512
      * conservative allowance for compiler-materialized f32 intermediates
        (upcast/diff blocks, (tb, 1) column temps).
    Budget of 24 MiB leaves headroom under the 32 MiB scoped-VMEM limit,
    which is safe on every generation (v7x physical VMEM is 64 MiB).
    """
    buffers = 4 * D * in_itemsize + 2 * 128 * 4
    wide_tmp = 3 * 4 * D if in_itemsize < 4 else 4 * D   # upcasts + diff (f32)
    col_tmp = 3 * 128 * 4                                 # live (tb,1) temps
    interm = max(wide_tmp, col_tmp) + 128 * 4
    per_row = buffers + interm
    rows = budget_bytes // per_row
    rows = max(16, (rows // 16) * 16)
    rows = min(rows, max_rows, _round_up(B, 16))
    return int(rows)


def _contrastive_kernel(x1_ref, x2_ref, label_ref, out_ref, *, margin, tb, b_total):
    # Native-dtype tiles; upcast on the VPU (plenty of slack, kernel is
    # HBM-bandwidth bound on every generation).
    x1 = x1_ref[...].astype(jnp.float32)        # (TB, D)
    x2 = x2_ref[...].astype(jnp.float32)        # (TB, D)
    label = label_ref[...]                       # (TB, 1) f32

    # F.pairwise_distance: sqrt(sum((x1 - x2 + eps)^2, axis=-1))
    diff = x1 - x2 + _PAIRWISE_EPS
    sq = jnp.sum(diff * diff, axis=-1, keepdims=True)     # (TB, 1) == dist^2
    dist = jnp.sqrt(sq)                                    # (TB, 1)

    hinge = jnp.maximum(margin - dist, 0.0)
    contrib = (1.0 - label) * sq + label * (hinge * hinge)  # (TB, 1)

    # Ragged-tail mask: the last block may extend past B and contain arbitrary
    # HBM garbage (possibly Inf/NaN after squaring).  jnp.where is a select,
    # so NaN/Inf in masked rows is discarded safely.  Only emitted when a
    # ragged tail actually exists (static check).
    if b_total % tb != 0:
        row_ids = pl.program_id(0) * tb + jax.lax.broadcasted_iota(
            jnp.int32, (tb, 1), 0)
        contrib = jnp.where(row_ids < b_total, contrib, 0.0)

    partial = jnp.sum(contrib)                             # scalar partial sum
    # Lane-dense write: one full 128-lane row per tile (unmasked vst).
    out_ref[...] = jnp.full((1, 128), partial, dtype=jnp.float32)


def contrastive_loss(output1, output2, label, margin=1.0, *, block_rows=None):
    """Pallas TPU implementation of ContrastiveLoss.forward.

    output1, output2: (B, D) arrays (any float dtype; DMA'd natively).
    label: (B,) or (B, 1) array.  Returns a scalar float32.
    `block_rows` optionally overrides the auto-chosen row-tile size (testing).
    """
    output1 = jnp.asarray(output1)
    output2 = jnp.asarray(output2)
    if output1.dtype != output2.dtype:
        ct = jnp.promote_types(output1.dtype, output2.dtype)
        output1 = output1.astype(ct)
        output2 = output2.astype(ct)
    label = jnp.asarray(label, jnp.float32).reshape(-1, 1)

    B, D = output1.shape
    assert output2.shape == (B, D)
    assert label.shape == (B, 1)

    if block_rows is None:
        tb = _choose_block_rows(B, D, output1.dtype.itemsize)
    else:
        tb = max(16, _round_up(int(block_rows), 16))
        tb = min(tb, _round_up(B, 16))

    num_tiles = int(pl.cdiv(B, tb))   # no padding: ragged tail handled in-kernel

    kernel = functools.partial(
        _contrastive_kernel, margin=float(margin), tb=tb, b_total=B)

    partials = pl.pallas_call(
        kernel,
        out_shape=jax.ShapeDtypeStruct((num_tiles, 128), jnp.float32),
        grid=(num_tiles,),
        in_specs=[
            pl.BlockSpec((tb, D), lambda i: (i, 0)),
            pl.BlockSpec((tb, D), lambda i: (i, 0)),
            pl.BlockSpec((tb, 1), lambda i: (i, 0)),
        ],
        out_specs=pl.BlockSpec((1, 128), lambda i: (i, 0)),
        compiler_params=pltpu.CompilerParams(
            dimension_semantics=("parallel",),
            vmem_limit_bytes=32 * 1024 * 1024,
        ),
    )(output1, output2, label)

    # Final reduction + mean in plain JAX (exactly once, divided by true B).
    return jnp.sum(partials[:, 0]) / B


def _reference(output1, output2, label, margin=1.0):
    # Pure-JAX reference mirroring the PyTorch module (computed in f32).
    o1 = jnp.asarray(output1, jnp.float32)
    o2 = jnp.asarray(output2, jnp.float32)
    lab = jnp.asarray(label, jnp.float32)
    diff = o1 - o2 + _PAIRWISE_EPS
    d = jnp.sqrt(jnp.sum(diff * diff, axis=-1))
    return jnp.mean((1.0 - lab) * d**2 + lab * jnp.maximum(margin - d, 0.0) ** 2)


if __name__ == "__main__":
    key = jax.random.PRNGKey(0)
    k1, k2, k3 = jax.random.split(key, 3)

    # Small case (single tile).
    B, D = 8, 32
    output1 = jax.random.normal(k1, (B, D), dtype=jnp.float32)
    output2 = jax.random.normal(k2, (B, D), dtype=jnp.float32)
    label = jax.random.bernoulli(k3, 0.5, (B,)).astype(jnp.float32)

    loss = jax.block_until_ready(contrastive_loss(output1, output2, label, margin=1.0))
    ref = _reference(output1, output2, label, margin=1.0)
    assert jnp.allclose(loss, ref, atol=1e-5, rtol=1e-5), (loss, ref)

    # Multi-tile grid with a ragged tail (no wrapper padding): force small tiles.
    B2, D2 = 200, 64
    kk1, kk2, kk3 = jax.random.split(jax.random.PRNGKey(1), 3)
    o1 = jax.random.normal(kk1, (B2, D2), dtype=jnp.float32)
    o2 = jax.random.normal(kk2, (B2, D2), dtype=jnp.float32)
    lab = jax.random.bernoulli(kk3, 0.5, (B2,)).astype(jnp.float32)
    loss2 = jax.block_until_ready(
        contrastive_loss(o1, o2, lab, margin=1.0, block_rows=64))
    ref2 = _reference(o1, o2, lab, margin=1.0)
    assert jnp.allclose(loss2, ref2, atol=1e-4, rtol=1e-4), (loss2, ref2)

    # Native bf16 inputs: DMA'd as bf16, upcast inside the kernel.
    b1 = o1.astype(jnp.bfloat16)
    b2 = o2.astype(jnp.bfloat16)
    loss3 = jax.block_until_ready(
        contrastive_loss(b1, b2, lab, margin=1.0, block_rows=64))
    ref3 = _reference(b1, b2, lab, margin=1.0)
    assert jnp.allclose(loss3, ref3, atol=1e-3, rtol=1e-3), (loss3, ref3)

    print("KERNEL_OK")
</pallas_src>

<mosaic_0001>
module attributes {stable_mosaic.version = 11 : i64} {
  func.func @_contrastive_kernel(%arg0: i32, %arg1: memref<16x32xf32, #tpu.memory_space<vmem>>, %arg2: memref<16x32xf32, #tpu.memory_space<vmem>>, %arg3: memref<16x1xf32, #tpu.memory_space<vmem>>, %arg4: memref<1x128xf32, #tpu.memory_space<vmem>>) attributes {dimension_semantics = [#tpu.dimension_semantics<parallel>], iteration_bounds = array<i64: 1>, scalar_prefetch = 0 : i64, scratch_operands = 0 : i64, tpu.core_type = #tpu.core_type<tc>, window_params = [{transform_indices = @transform_0, window_bounds = array<i64: 16, 32>}, {transform_indices = @transform_1, window_bounds = array<i64: 16, 32>}, {transform_indices = @transform_2, window_bounds = array<i64: 16, 1>}, {transform_indices = @transform_3, window_bounds = array<i64: 1, 128>}]} {
    %c0 = arith.constant 0 : index
    %c0_0 = arith.constant 0 : index
    %0 = vector.load %arg1[%c0, %c0_0] : memref<16x32xf32, #tpu.memory_space<vmem>>, vector<16x32xf32>
    %c0_1 = arith.constant 0 : index
    %c0_2 = arith.constant 0 : index
    %1 = vector.load %arg2[%c0_1, %c0_2] : memref<16x32xf32, #tpu.memory_space<vmem>>, vector<16x32xf32>
    %c0_3 = arith.constant 0 : index
    %c0_4 = arith.constant 0 : index
    %2 = vector.load %arg3[%c0_3, %c0_4] : memref<16x1xf32, #tpu.memory_space<vmem>>, vector<16x1xf32>
    %3 = arith.subf %0, %1 : vector<16x32xf32>
    %cst = arith.constant 9.99999997E-7 : f32
    %4 = vector.broadcast %cst : f32 to vector<16x32xf32>
    %5 = arith.addf %3, %4 : vector<16x32xf32>
    %6 = arith.mulf %5, %5 : vector<16x32xf32>
    %cst_5 = arith.constant dense<0.000000e+00> : vector<16xf32>
    %7 = vector.multi_reduction <add>, %6, %cst_5 [1] : vector<16x32xf32> to vector<16xf32>
    %8 = vector.shape_cast %7 : vector<16xf32> to vector<16x1xf32>
    %9 = math.sqrt %8 : vector<16x1xf32>
    %cst_6 = arith.constant 1.000000e+00 : f32
    %10 = vector.broadcast %cst_6 : f32 to vector<16x1xf32>
    %11 = arith.subf %10, %9 : vector<16x1xf32>
    %cst_7 = arith.constant 0.000000e+00 : f32
    %12 = vector.broadcast %cst_7 : f32 to vector<16x1xf32>
    %13 = arith.maximumf %11, %12 : vector<16x1xf32>
    %cst_8 = arith.constant 1.000000e+00 : f32
    %14 = vector.broadcast %cst_8 : f32 to vector<16x1xf32>
    %15 = arith.subf %14, %2 : vector<16x1xf32>
    %16 = arith.mulf %15, %8 : vector<16x1xf32>
    %17 = arith.mulf %13, %13 : vector<16x1xf32>
    %18 = arith.mulf %2, %17 : vector<16x1xf32>
    %19 = arith.addf %16, %18 : vector<16x1xf32>
    %c16_i32 = arith.constant 16 : i32
    %20 = arith.muli %arg0, %c16_i32 : i32
    %21 = tpu.iota {dimensions = array<i32: 0>} : vector<16x1xi32>
    %22 = vector.broadcast %20 : i32 to vector<16x1xi32>
    %23 = arith.addi %22, %21 : vector<16x1xi32>
    %c8_i32 = arith.constant 8 : i32
    %24 = vector.broadcast %c8_i32 : i32 to vector<16x1xi32>
    %25 = arith.cmpi slt, %23, %24 : vector<16x1xi32>
    %cst_9 = arith.constant 0.000000e+00 : f32
    %26 = vector.broadcast %cst_9 : f32 to vector<16x1xf32>
    %27 = arith.select %25, %19, %26 : vector<16x1xi1>, vector<16x1xf32>
    %28 = vector.shape_cast %27 : vector<16x1xf32> to vector<1x16x1xf32>
    %cst_10 = arith.constant dense<0.000000e+00> : vector<1xf32>
    %29 = vector.multi_reduction <add>, %28, %cst_10 [1, 2] : vector<1x16x1xf32> to vector<1xf32>
    %30 = vector.shape_cast %29 : vector<1xf32> to vector<1x1x1xf32>
    %31 = vector.extract %30[0, 0, 0] : f32 from vector<1x1x1xf32>
    %32 = vector.broadcast %31 : f32 to vector<1x128xf32>
    %c0_11 = arith.constant 0 : index
    %c0_12 = arith.constant 0 : index
    %33 = vector.load %arg4[%c0_11, %c0_12] : memref<1x128xf32, #tpu.memory_space<vmem>>, vector<1x128xf32>
    tpu.vector_store %arg4[%c0_11, %c0_12], %32 {strides = array<i32>} : memref<1x128xf32, #tpu.memory_space<vmem>>, vector<1x128xf32>,
    return
  }
  func.func @transform_0(%arg0: i32) -> (i32, i32) {
    %c0_i32 = arith.constant 0 : i32
    %c0_i32_0 = arith.constant 0 : i32
    return %arg0, %c0_i32 : i32, i32
  }
  func.func @transform_1(%arg0: i32) -> (i32, i32) {
    %c0_i32 = arith.constant 0 : i32
    %c0_i32_0 = arith.constant 0 : i32
    return %arg0, %c0_i32 : i32, i32
  }
  func.func @transform_2(%arg0: i32) -> (i32, i32) {
    %c0_i32 = arith.constant 0 : i32
    %c0_i32_0 = arith.constant 0 : i32
    return %arg0, %c0_i32 : i32, i32
  }
  func.func @transform_3(%arg0: i32) -> (i32, i32) {
    %c0_i32 = arith.constant 0 : i32
    %c0_i32_0 = arith.constant 0 : i32
    return %arg0, %c0_i32 : i32, i32
  }
}

</mosaic_0001>

<llo_original>
// kernel: tpu_custom_call.1
$region0: #{tpu_custom_call.1}
  #allocation0 [shape = 'u32[]', space=smem, size = 0x4, offset = 0x4, fixed_abs, tag = 'smem constant byte address 0x4 - core index']
  #allocation1 [shape = 'u32[144,128]{1,0:T(1,128)}', space=vmem, size = 0x12000, scoped, tag = 'internal scratch']
  %s0 = inlined_call_operand.vmem [shape: f32[8,32], index: 0, kind: input, shape index: {}]
  %s1 = inlined_call_operand.hbm [shape: f32[8,32], index: 1, kind: input, shape index: {}]
  %s2 = inlined_call_operand.vmem [shape: f32[8,1], index: 2, kind: input, shape index: {}]
  %s3 = inlined_call_operand.hbm [shape: f32[1,128], index: 3, kind: output, shape index: {}]
  %s4 = sld [smem:[#allocation0]]
  $region26: #{tpu_custom_call.1} parent=0
    _
  %s6 = ssub.s32 1, %s4
  %s7 = scalar_select 0, %s6, %s4
  $region1: #{tpu_custom_call.1} parent=0
    #allocation2 [shape = 'u8[8192]{0}', space=vmem, size = 0x2000, scoped, tag = 'input window, operand 1, single buffered']
    #allocation3 [shape = 's32[1]{0}', space=sflag, size = 0x4, scoped, tag = 'scoped memory for tpu_custom_call.1']
    #allocation4 [shape = 's32[1]{0}', space=sflag, size = 0x4, scoped, tag = 'scoped memory for tpu_custom_call.1']
    #allocation5 [shape = 'u8[512]{0}', space=vmem, size = 0x400, scoped, tag = 'output window, operand 0, single buffered']
    %8 = vsyncpa [#allocation3], 0
    %9 = vsyncpa [#allocation4], 0
    // Predicated region
    $region2: #{tpu_custom_call.1} parent=1 // pred_check
      _
    $region3: #{tpu_custom_call.1} parent=1 // pred_check_branch
      %11 = sbr.rel (0) target = $region5
    $region4: #{tpu_custom_call.1} parent=1 // pred_region
      _
    $region5: #{tpu_custom_call.1} parent=1 // pred_fallthru
      _
    // Predicated region
    $region6: #{tpu_custom_call.1} parent=1 // pred_check
      _
    $region7: #{tpu_custom_call.1} parent=1 // pred_check_branch
      %13 = sbr.rel (0) target = $region9
    $region8: #{tpu_custom_call.1} parent=1 // pred_region
      %s15 = ssub.s32 256, 128
      %16 = vsyncadd [#allocation3], %s15
      %s17 = sshll.u32 [#allocation2], 4
      %s18 = int_to_ptr.vmem [resolvable:$true] %s17
      %23 = dma.hbm_to_vmem [thread:$0]  %s1, 128, %s18, [#allocation3], 128, 128, 8
    $region9: #{tpu_custom_call.1} parent=1 // pred_fallthru
      _
    // Predicated region
    $region10: #{tpu_custom_call.1} parent=1 // pred_check
      _
    $region11: #{tpu_custom_call.1} parent=1 // pred_check_branch
      %25 = sbr.rel (0) target = $region13
    $region12: #{tpu_custom_call.1} parent=1 // pred_region
      _
    $region13: #{tpu_custom_call.1} parent=1 // pred_fallthru
      _
    // Predicated region
    $region14: #{tpu_custom_call.1} parent=1 // pred_check
      _
    $region15: #{tpu_custom_call.1} parent=1 // pred_check_branch
      %27 = sbr.rel (0) target = $region17
    $region16: #{tpu_custom_call.1} parent=1 // pred_region
      %28 = dma.done [#allocation3], 256
    $region17: #{tpu_custom_call.1} parent=1 // pred_fallthru
      _
    %v29 = vld [vmem:[%s0] sm:$0xff]
    %v30 = vld [vmem:[%s0 + $0x8] sm:$0xff]
    %v31 = vld [vmem:[#allocation2] sm:$0xff]
    %v32 = vld [vmem:[#allocation2 + $0x8] sm:$0xff]
    %v33 = vld [vmem:[%s2] sm:$0xff]
    %v34 = vld [vmem:[%s2 + $0x8] sm:$0xff]
    %v35 = vsub.f32 %v29, %v31
    %v36 = vsub.f32 %v30, %v32
    %v37 = vadd.f32 %v35, 1e-06
    %v38 = vadd.f32 %v36, 1e-06
    %v39 = vmul.f32 %v37, %v37
    %v40 = vmul.f32 %v38, %v38
    %vm41 = vcmask 261120
    %v42 = vsel %vm41, %v39, 0.0
    %43 = vadd.xlane.f32.xlu0 %v42
    %v44 = vpop.xlane.xlu0 %43
    %v45 = vsel %vm41, %v40, 0.0
    %46 = vadd.xlane.f32.xlu0 %v45
    %v47 = vpop.xlane.xlu0 %46
    %v48 = vrsqrt.pop %v44
    %v49 = vmul.f32 %v44, %v48
    %vm50 = vcmp.eq.f32.partialorder %v44, inf
    %v51 = vsel %vm50, %v44, %v49
    %vm52 = vcmp.eq.f32.partialorder %v44, 0.0
    %v53 = vand.u32 %v44, 2147483648
    %v54 = vsel %vm52, %v53, %v51
    %v55 = vrsqrt.pop %v47
    %v56 = vmul.f32 %v47, %v55
    %vm57 = vcmp.eq.f32.partialorder %v47, inf
    %v58 = vsel %vm57, %v47, %v56
    %vm59 = vcmp.eq.f32.partialorder %v47, 0.0
    %v60 = vand.u32 %v47, 2147483648
    %v61 = vsel %vm59, %v60, %v58
    %v62 = vsub.f32 1.0, %v54
    %v63 = vsub.f32 1.0, %v61
    %v64 = vmax.f32 %v62, 0.0
    %v65 = vmax.f32 %v63, 0.0
    %v66 = vsub.f32 1.0, %v33
    %v67 = vsub.f32 1.0, %v34
    %v68 = vmul.f32 %v66, %v44
    %v69 = vmul.f32 %v67, %v47
    %v70 = vmul.f32 %v64, %v64
    %v71 = vmul.f32 %v65, %v65
    %v72 = vmul.f32 %v33, %v70
    %v73 = vmul.f32 %v34, %v71
    %v74 = vadd.f32 %v68, %v72
    %v75 = vadd.f32 %v69, %v73
    %s76 = smul.u32 0, 16
    %v77 = vlaneseq
    %v78 = vshrl.u32 %v77, 7
    %v79 = vadd.s32 %v78, 8
    %v80 = vstv %s76
    %v81 = vadd.s32 %v80, %v78
    %v82 = vadd.s32 %v80, %v79
    %vm83 = vcmp.lt.s32.totalorder %v81, 8
    %vm84 = vcmp.lt.s32.totalorder %v82, 8
    %v85 = vsel %vm83, %v74, 0.0
    %v86 = vsel %vm84, %v75, 0.0
    %vm87 = vcmask 7168
    %v88 = vsel %vm87, %v85, 0.0
    %v89 = vsel %vm87, %v86, 0.0
    %v90 = vadd.f32 %v88, %v89
    %91 = vadd.xlane.f32.xlu0 %v90
    %v92 = vpop.xlane.xlu0 %91
    %v93 = vrot.slane %v92, 4
    %v94 = vadd.f32 %v92, %v93
    %v95 = vrot.slane %v94, 2
    %v96 = vadd.f32 %v94, %v95
    %v97 = vrot.slane %v96, 1
    %v98 = vadd.f32 %v96, %v97
    %s99 = vtos %v98
    %v100 = vstv %s99
    %101 = vst [vmem:[#allocation5] sm:$0x1] %v100
    // Predicated region
    $region18: #{tpu_custom_call.1} parent=1 // pred_check
      _
    $region19: #{tpu_custom_call.1} parent=1 // pred_check_branch
      %103 = sbr.rel (0) target = $region21
    $region20: #{tpu_custom_call.1} parent=1 // pred_region
      %s105 = ssub.s32 16, 16
      %106 = vsyncadd [#allocation4], %s105
      %s108 = sshll.u32 [#allocation5], 4
      %s109 = int_to_ptr.vmem [resolvable:$true] %s108
      %111 = dma.vmem_to_hbm [thread:$0]  %s109, 16, %s3, [#allocation4]
    $region21: #{tpu_custom_call.1} parent=1 // pred_fallthru
      _
    // Predicated region
    $region22: #{tpu_custom_call.1} parent=1 // pred_check
      _
    $region23: #{tpu_custom_call.1} parent=1 // pred_check_branch
      %113 = sbr.rel (0) target = $region25
    $region24: #{tpu_custom_call.1} parent=1 // pred_region
      %114 = dma.done [#allocation4], 16
    $region25: #{tpu_custom_call.1} parent=1 // pred_fallthru
      _
    %115 = vsyncpa [#allocation3], 1
    %116 = vsyncpa [#allocation4], 1

</llo_original>
